<compile_context>
chip_gen: v7x
topology: tpu7x:2x2x1
jax: 0.10.0
libtpu: 0.0.40
codegen_flags: <defaults>
</compile_context>

<pallas_src>
import jax
import jax.numpy as jnp
from jax import lax
from jax.experimental import pallas as pl
from jax.experimental.pallas import tpu as pltpu

BN_EPS = 1e-5
NORM_EPS = 1e-12


def _bn_train_folded(x, gamma, beta):
    """BatchNorm1d (training mode) folded into one per-feature scale + shift.

    Single pass over the tile: var = E[x^2] - mu^2 (biased), then
    y = x * scale + shift with scale = gamma * rsqrt(var + eps),
    shift = beta - mu * scale.
    """
    mu = jnp.mean(x, axis=0, keepdims=True)
    msq = jnp.mean(x * x, axis=0, keepdims=True)
    var = msq - mu * mu
    scale = gamma * lax.rsqrt(var + BN_EPS)
    shift = beta - mu * scale
    return x * scale + shift


def routing_b3_kernel(t_ft_ref, w1_ref, w2_ref, w3_ref, pack_ref, gate_ref):
    # Static layout of the packed small-parameter row (Python ints at trace time).
    L = w1_ref.shape[1]      # n_labels
    n_ft = w2_ref.shape[1]   # 256
    offs = {}
    off = 0
    for name, width in (("b1", L), ("g1", L), ("be1", L),
                        ("b2", n_ft), ("g2", n_ft), ("be2", n_ft),
                        ("b3", L), ("g3", L), ("be3", L),
                        ("w4", L), ("b4", 1)):
        offs[name] = (off, width)
        off += width

    def pk(name):
        start, width = offs[name]
        return pack_ref[:, start:start + width]          # (1, width) f32

    # --- routing1: Linear(F, L) -> BN(L) -> ReLU ---
    x = t_ft_ref[...]                                    # bf16 (B, F)
    h = jnp.dot(x, w1_ref[...], preferred_element_type=jnp.float32) + pk("b1")
    h = jnp.maximum(_bn_train_folded(h, pk("g1"), pk("be1")), 0.0)

    # --- routing1: Linear(L, n_ft) -> BN(n_ft) -> ReLU ---
    h = jnp.dot(h.astype(jnp.bfloat16), w2_ref[...],
                preferred_element_type=jnp.float32) + pk("b2")
    h = jnp.maximum(_bn_train_folded(h, pk("g2"), pk("be2")), 0.0)

    # --- F.normalize: x / max(||x||_2, 1e-12), as a single rsqrt ---
    sumsq = jnp.sum(h * h, axis=-1, keepdims=True)
    h = h * lax.rsqrt(jnp.maximum(sumsq, NORM_EPS * NORM_EPS))

    # --- routing: Linear(n_ft, L) -> BN(L) -> ReLU ---
    r = jnp.dot(h.astype(jnp.bfloat16), w3_ref[...],
                preferred_element_type=jnp.float32) + pk("b3")
    r = jnp.maximum(_bn_train_folded(r, pk("g3"), pk("be3")), 0.0)

    # --- routing: Linear(L, 1) -> Sigmoid, emitted lane-dense as (1, B) ---
    # logit[0, b] = sum_l w4[0, l] * r[b, l]   (i.e. (r @ w4.T)^T), f32 on MXU.
    logit = lax.dot_general(pk("w4"), r,
                            dimension_numbers=(((1,), (1,)), ((), ())),
                            preferred_element_type=jnp.float32)
    gate_ref[...] = jax.nn.sigmoid(logit + pk("b4"))


@jax.jit
def routing_b3_forward(t_logits, t_ft, params):
    """Pallas wrapper. t_logits is unused (matches the PyTorch forward)."""
    del t_logits
    B = t_ft.shape[0]
    bf16 = jnp.bfloat16

    # bf16 only on the MXU/DMA path; elementwise math stays f32 inside the kernel.
    t_ft_bf = t_ft.astype(bf16)
    w1 = params["w1"].astype(bf16)
    w2 = params["w2"].astype(bf16)
    w3 = params["w3"].astype(bf16)

    # Pack all small per-feature params (f32) into one row -> one DMA, one VMEM alloc.
    pack = jnp.concatenate([
        params["b1"].reshape(-1), params["g1"].reshape(-1), params["be1"].reshape(-1),
        params["b2"].reshape(-1), params["g2"].reshape(-1), params["be2"].reshape(-1),
        params["b3"].reshape(-1), params["g3"].reshape(-1), params["be3"].reshape(-1),
        params["w4"].reshape(-1), params["b4"].reshape(-1),
    ]).astype(jnp.float32).reshape(1, -1)

    vmem = pl.BlockSpec(memory_space=pltpu.MemorySpace.VMEM)
    gate_row = pl.pallas_call(
        routing_b3_kernel,
        out_shape=jax.ShapeDtypeStruct((1, B), jnp.float32),
        in_specs=[vmem] * 5,
        out_specs=vmem,
    )(t_ft_bf, w1, w2, w3, pack)
    return gate_row.reshape(B, 1)


def make_params(key, num_features, n_labels, n_ft):
    """Deterministic synthetic parameters (weights pre-transposed to (in, out))."""
    ks = jax.random.split(key, 8)
    s = 0.05
    f32 = jnp.float32
    return {
        # routing1: Linear(F, L), BN(L), Linear(L, n_ft), BN(n_ft)
        "w1": s * jax.random.normal(ks[0], (num_features, n_labels), f32),
        "b1": s * jax.random.normal(ks[1], (1, n_labels), f32),
        "g1": jnp.ones((1, n_labels), f32),
        "be1": jnp.zeros((1, n_labels), f32),
        "w2": s * jax.random.normal(ks[2], (n_labels, n_ft), f32),
        "b2": s * jax.random.normal(ks[3], (1, n_ft), f32),
        "g2": jnp.ones((1, n_ft), f32),
        "be2": jnp.zeros((1, n_ft), f32),
        # routing: Linear(n_ft, L), BN(L), Linear(L, 1)
        "w3": s * jax.random.normal(ks[4], (n_ft, n_labels), f32),
        "b3": s * jax.random.normal(ks[5], (1, n_labels), f32),
        "g3": jnp.ones((1, n_labels), f32),
        "be3": jnp.zeros((1, n_labels), f32),
        "w4": s * jax.random.normal(ks[6], (1, n_labels), f32),  # (out=1, in=L) row
        "b4": s * jax.random.normal(ks[7], (1, 1), f32),
    }


def _bn_ref(x, g, b):
    mu = jnp.mean(x, axis=0, keepdims=True)
    var = jnp.mean((x - mu) ** 2, axis=0, keepdims=True)
    return g * (x - mu) / jnp.sqrt(var + BN_EPS) + b


def reference_forward_f32(t_ft, p):
    """Full-f32 pure-JAX reference of the exact PyTorch semantics."""
    h = jnp.maximum(_bn_ref(t_ft @ p["w1"] + p["b1"], p["g1"], p["be1"]), 0.0)
    h = jnp.maximum(_bn_ref(h @ p["w2"] + p["b2"], p["g2"], p["be2"]), 0.0)
    h = h / jnp.maximum(jnp.linalg.norm(h, axis=-1, keepdims=True), NORM_EPS)
    r = jnp.maximum(_bn_ref(h @ p["w3"] + p["b3"], p["g3"], p["be3"]), 0.0)
    return jax.nn.sigmoid(r @ p["w4"].T + p["b4"])


def reference_forward_bf16_matmul(t_ft, p):
    """Same semantics, but with bf16 matmul inputs (matches the kernel precision)."""
    bf16 = jnp.bfloat16

    def mm(a, w):
        return jnp.dot(a.astype(bf16), w.astype(bf16),
                       preferred_element_type=jnp.float32)

    h = jnp.maximum(_bn_ref(mm(t_ft, p["w1"]) + p["b1"], p["g1"], p["be1"]), 0.0)
    h = jnp.maximum(_bn_ref(mm(h, p["w2"]) + p["b2"], p["g2"], p["be2"]), 0.0)
    h = h / jnp.maximum(jnp.linalg.norm(h, axis=-1, keepdims=True), NORM_EPS)
    r = jnp.maximum(_bn_ref(mm(h, p["w3"]) + p["b3"], p["g3"], p["be3"]), 0.0)
    return jax.nn.sigmoid(r @ p["w4"].T + p["b4"])


if __name__ == "__main__":
    # Small shapes consistent with the module's forward:
    #   t_logits: (B, n_labels)  [unused], t_ft: (B, num_features)
    B, num_features, n_labels, n_ft = 8, 32, 128, 256

    key = jax.random.PRNGKey(0)
    k_log, k_ft, k_par = jax.random.split(key, 3)
    t_logits = jax.random.normal(k_log, (B, n_labels), jnp.float32)
    t_ft = jax.random.normal(k_ft, (B, num_features), jnp.float32)
    params = make_params(k_par, num_features, n_labels, n_ft)

    gate = jax.block_until_ready(routing_b3_forward(t_logits, t_ft, params))
    assert gate.shape == (B, 1)

    # Tight check vs. a reference using the same bf16 MXU inputs.
    ref_matched = reference_forward_bf16_matmul(t_ft, params)
    assert jnp.allclose(gate, ref_matched, atol=5e-3, rtol=5e-3), (gate, ref_matched)

    # Loose check vs. the full-f32 PyTorch-semantics reference (bf16 weight cast
    # is the only approximation).
    ref_f32 = reference_forward_f32(t_ft, params)
    assert jnp.allclose(gate, ref_f32, atol=3e-2, rtol=0.0), (gate, ref_f32)

    print("KERNEL_OK")
</pallas_src>

<mosaic_0001>
module attributes {stable_mosaic.version = 11 : i64} {
  func.func @routing_b3_kernel(%arg0: memref<8x32xbf16, #tpu.memory_space<vmem>>, %arg1: memref<32x128xbf16, #tpu.memory_space<vmem>>, %arg2: memref<128x256xbf16, #tpu.memory_space<vmem>>, %arg3: memref<256x128xbf16, #tpu.memory_space<vmem>>, %arg4: memref<1x1665xf32, #tpu.memory_space<vmem>>, %arg5: memref<1x8xf32, #tpu.memory_space<vmem>>) attributes {dimension_semantics = [], scalar_prefetch = 0 : i64, scratch_operands = 0 : i64, tpu.core_type = #tpu.core_type<tc>} {
    %c0 = arith.constant 0 : index
    %c0_0 = arith.constant 0 : index
    %0 = vector.load %arg0[%c0, %c0_0] : memref<8x32xbf16, #tpu.memory_space<vmem>>, vector<8x32xbf16>
    %c0_1 = arith.constant 0 : index
    %c0_2 = arith.constant 0 : index
    %1 = vector.load %arg1[%c0_1, %c0_2] : memref<32x128xbf16, #tpu.memory_space<vmem>>, vector<32x128xbf16>
    %cst = arith.constant dense<0.000000e+00> : vector<8x128xf32>
    %2 = tpu.matmul %0, %1, %cst {dimension_numbers = #tpu.dot_dimension_numbers<[1], [0], [0], [1], [0, 0, 1, 1], [], []>} : vector<8x32xbf16>, vector<32x128xbf16>, vector<8x128xf32> -> vector<8x128xf32>
    %c0_3 = arith.constant 0 : index
    %c0_4 = arith.constant 0 : index
    %3 = vector.load %arg4[%c0_3, %c0_4] : memref<1x1665xf32, #tpu.memory_space<vmem>>, vector<1x128xf32>
    %4 = vector.broadcast %3 : vector<1x128xf32> to vector<8x128xf32>
    %5 = arith.addf %2, %4 : vector<8x128xf32>
    %c0_5 = arith.constant 0 : index
    %c128 = arith.constant 128 : index
    %6 = vector.load %arg4[%c0_5, %c128] : memref<1x1665xf32, #tpu.memory_space<vmem>>, vector<1x128xf32>
    %c0_6 = arith.constant 0 : index
    %c256 = arith.constant 256 : index
    %7 = vector.load %arg4[%c0_6, %c256] : memref<1x1665xf32, #tpu.memory_space<vmem>>, vector<1x128xf32>
    %cst_7 = arith.constant dense<0.000000e+00> : vector<128xf32>
    %8 = vector.multi_reduction <add>, %5, %cst_7 [0] : vector<8x128xf32> to vector<128xf32>
    %9 = vector.shape_cast %8 : vector<128xf32> to vector<1x128xf32>
    %cst_8 = arith.constant 8.000000e+00 : f32
    %10 = vector.broadcast %cst_8 : f32 to vector<1x128xf32>
    %11 = arith.divf %9, %10 : vector<1x128xf32>
    %12 = arith.mulf %5, %5 : vector<8x128xf32>
    %cst_9 = arith.constant dense<0.000000e+00> : vector<128xf32>
    %13 = vector.multi_reduction <add>, %12, %cst_9 [0] : vector<8x128xf32> to vector<128xf32>
    %14 = vector.shape_cast %13 : vector<128xf32> to vector<1x128xf32>
    %cst_10 = arith.constant 8.000000e+00 : f32
    %15 = vector.broadcast %cst_10 : f32 to vector<1x128xf32>
    %16 = arith.divf %14, %15 : vector<1x128xf32>
    %17 = arith.mulf %11, %11 : vector<1x128xf32>
    %18 = arith.subf %16, %17 : vector<1x128xf32>
    %cst_11 = arith.constant 9.99999974E-6 : f32
    %19 = vector.broadcast %cst_11 : f32 to vector<1x128xf32>
    %20 = arith.addf %18, %19 : vector<1x128xf32>
    %21 = math.rsqrt %20 : vector<1x128xf32>
    %22 = arith.mulf %6, %21 : vector<1x128xf32>
    %23 = arith.mulf %11, %22 : vector<1x128xf32>
    %24 = arith.subf %7, %23 : vector<1x128xf32>
    %25 = vector.broadcast %22 : vector<1x128xf32> to vector<8x128xf32>
    %26 = arith.mulf %5, %25 : vector<8x128xf32>
    %27 = vector.broadcast %24 : vector<1x128xf32> to vector<8x128xf32>
    %28 = arith.addf %26, %27 : vector<8x128xf32>
    %cst_12 = arith.constant 0.000000e+00 : f32
    %29 = vector.broadcast %cst_12 : f32 to vector<8x128xf32>
    %30 = arith.maximumf %28, %29 : vector<8x128xf32>
    %31 = arith.truncf %30 : vector<8x128xf32> to vector<8x128xbf16>
    %c0_13 = arith.constant 0 : index
    %c0_14 = arith.constant 0 : index
    %32 = vector.load %arg2[%c0_13, %c0_14] : memref<128x256xbf16, #tpu.memory_space<vmem>>, vector<128x256xbf16>
    %cst_15 = arith.constant dense<0.000000e+00> : vector<8x256xf32>
    %33 = tpu.matmul %31, %32, %cst_15 {dimension_numbers = #tpu.dot_dimension_numbers<[1], [0], [0], [1], [0, 0, 1, 1], [], []>} : vector<8x128xbf16>, vector<128x256xbf16>, vector<8x256xf32> -> vector<8x256xf32>
    %c0_16 = arith.constant 0 : index
    %c384 = arith.constant 384 : index
    %34 = vector.load %arg4[%c0_16, %c384] : memref<1x1665xf32, #tpu.memory_space<vmem>>, vector<1x256xf32>
    %35 = vector.broadcast %34 : vector<1x256xf32> to vector<8x256xf32>
    %36 = arith.addf %33, %35 : vector<8x256xf32>
    %c0_17 = arith.constant 0 : index
    %c640 = arith.constant 640 : index
    %37 = vector.load %arg4[%c0_17, %c640] : memref<1x1665xf32, #tpu.memory_space<vmem>>, vector<1x256xf32>
    %c0_18 = arith.constant 0 : index
    %c896 = arith.constant 896 : index
    %38 = vector.load %arg4[%c0_18, %c896] : memref<1x1665xf32, #tpu.memory_space<vmem>>, vector<1x256xf32>
    %cst_19 = arith.constant dense<0.000000e+00> : vector<256xf32>
    %39 = vector.multi_reduction <add>, %36, %cst_19 [0] : vector<8x256xf32> to vector<256xf32>
    %40 = vector.shape_cast %39 : vector<256xf32> to vector<1x256xf32>
    %cst_20 = arith.constant 8.000000e+00 : f32
    %41 = vector.broadcast %cst_20 : f32 to vector<1x256xf32>
    %42 = arith.divf %40, %41 : vector<1x256xf32>
    %43 = arith.mulf %36, %36 : vector<8x256xf32>
    %cst_21 = arith.constant dense<0.000000e+00> : vector<256xf32>
    %44 = vector.multi_reduction <add>, %43, %cst_21 [0] : vector<8x256xf32> to vector<256xf32>
    %45 = vector.shape_cast %44 : vector<256xf32> to vector<1x256xf32>
    %cst_22 = arith.constant 8.000000e+00 : f32
    %46 = vector.broadcast %cst_22 : f32 to vector<1x256xf32>
    %47 = arith.divf %45, %46 : vector<1x256xf32>
    %48 = arith.mulf %42, %42 : vector<1x256xf32>
    %49 = arith.subf %47, %48 : vector<1x256xf32>
    %cst_23 = arith.constant 9.99999974E-6 : f32
    %50 = vector.broadcast %cst_23 : f32 to vector<1x256xf32>
    %51 = arith.addf %49, %50 : vector<1x256xf32>
    %52 = math.rsqrt %51 : vector<1x256xf32>
    %53 = arith.mulf %37, %52 : vector<1x256xf32>
    %54 = arith.mulf %42, %53 : vector<1x256xf32>
    %55 = arith.subf %38, %54 : vector<1x256xf32>
    %56 = vector.broadcast %53 : vector<1x256xf32> to vector<8x256xf32>
    %57 = arith.mulf %36, %56 : vector<8x256xf32>
    %58 = vector.broadcast %55 : vector<1x256xf32> to vector<8x256xf32>
    %59 = arith.addf %57, %58 : vector<8x256xf32>
    %cst_24 = arith.constant 0.000000e+00 : f32
    %60 = vector.broadcast %cst_24 : f32 to vector<8x256xf32>
    %61 = arith.maximumf %59, %60 : vector<8x256xf32>
    %62 = arith.mulf %61, %61 : vector<8x256xf32>
    %cst_25 = arith.constant dense<0.000000e+00> : vector<8xf32>
    %63 = vector.multi_reduction <add>, %62, %cst_25 [1] : vector<8x256xf32> to vector<8xf32>
    %64 = vector.shape_cast %63 : vector<8xf32> to vector<8x1xf32>
    %cst_26 = arith.constant 1.000000e-24 : f32
    %65 = vector.broadcast %cst_26 : f32 to vector<8x1xf32>
    %66 = arith.maximumf %64, %65 : vector<8x1xf32>
    %67 = math.rsqrt %66 : vector<8x1xf32>
    %68 = vector.broadcast %67 : vector<8x1xf32> to vector<8x256xf32>
    %69 = arith.mulf %61, %68 : vector<8x256xf32>
    %70 = arith.truncf %69 : vector<8x256xf32> to vector<8x256xbf16>
    %c0_27 = arith.constant 0 : index
    %c0_28 = arith.constant 0 : index
    %71 = vector.load %arg3[%c0_27, %c0_28] : memref<256x128xbf16, #tpu.memory_space<vmem>>, vector<256x128xbf16>
    %cst_29 = arith.constant dense<0.000000e+00> : vector<8x128xf32>
    %72 = tpu.matmul %70, %71, %cst_29 {dimension_numbers = #tpu.dot_dimension_numbers<[1], [0], [0], [1], [0, 0, 1, 1], [], []>} : vector<8x256xbf16>, vector<256x128xbf16>, vector<8x128xf32> -> vector<8x128xf32>
    %c0_30 = arith.constant 0 : index
    %c1152 = arith.constant 1152 : index
    %73 = vector.load %arg4[%c0_30, %c1152] : memref<1x1665xf32, #tpu.memory_space<vmem>>, vector<1x128xf32>
    %74 = vector.broadcast %73 : vector<1x128xf32> to vector<8x128xf32>
    %75 = arith.addf %72, %74 : vector<8x128xf32>
    %c0_31 = arith.constant 0 : index
    %c1280 = arith.constant 1280 : index
    %76 = vector.load %arg4[%c0_31, %c1280] : memref<1x1665xf32, #tpu.memory_space<vmem>>, vector<1x128xf32>
    %c0_32 = arith.constant 0 : index
    %c1408 = arith.constant 1408 : index
    %77 = vector.load %arg4[%c0_32, %c1408] : memref<1x1665xf32, #tpu.memory_space<vmem>>, vector<1x128xf32>
    %cst_33 = arith.constant dense<0.000000e+00> : vector<128xf32>
    %78 = vector.multi_reduction <add>, %75, %cst_33 [0] : vector<8x128xf32> to vector<128xf32>
    %79 = vector.shape_cast %78 : vector<128xf32> to vector<1x128xf32>
    %cst_34 = arith.constant 8.000000e+00 : f32
    %80 = vector.broadcast %cst_34 : f32 to vector<1x128xf32>
    %81 = arith.divf %79, %80 : vector<1x128xf32>
    %82 = arith.mulf %75, %75 : vector<8x128xf32>
    %cst_35 = arith.constant dense<0.000000e+00> : vector<128xf32>
    %83 = vector.multi_reduction <add>, %82, %cst_35 [0] : vector<8x128xf32> to vector<128xf32>
    %84 = vector.shape_cast %83 : vector<128xf32> to vector<1x128xf32>
    %cst_36 = arith.constant 8.000000e+00 : f32
    %85 = vector.broadcast %cst_36 : f32 to vector<1x128xf32>
    %86 = arith.divf %84, %85 : vector<1x128xf32>
    %87 = arith.mulf %81, %81 : vector<1x128xf32>
    %88 = arith.subf %86, %87 : vector<1x128xf32>
    %cst_37 = arith.constant 9.99999974E-6 : f32
    %89 = vector.broadcast %cst_37 : f32 to vector<1x128xf32>
    %90 = arith.addf %88, %89 : vector<1x128xf32>
    %91 = math.rsqrt %90 : vector<1x128xf32>
    %92 = arith.mulf %76, %91 : vector<1x128xf32>
    %93 = arith.mulf %81, %92 : vector<1x128xf32>
    %94 = arith.subf %77, %93 : vector<1x128xf32>
    %95 = vector.broadcast %92 : vector<1x128xf32> to vector<8x128xf32>
    %96 = arith.mulf %75, %95 : vector<8x128xf32>
    %97 = vector.broadcast %94 : vector<1x128xf32> to vector<8x128xf32>
    %98 = arith.addf %96, %97 : vector<8x128xf32>
    %cst_38 = arith.constant 0.000000e+00 : f32
    %99 = vector.broadcast %cst_38 : f32 to vector<8x128xf32>
    %100 = arith.maximumf %98, %99 : vector<8x128xf32>
    %c0_39 = arith.constant 0 : index
    %c1536 = arith.constant 1536 : index
    %101 = vector.load %arg4[%c0_39, %c1536] : memref<1x1665xf32, #tpu.memory_space<vmem>>, vector<1x128xf32>
    %cst_40 = arith.constant dense<0.000000e+00> : vector<1x8xf32>
    %102 = tpu.matmul %101, %100, %cst_40 {dimension_numbers = #tpu.dot_dimension_numbers<[1], [1], [0], [0], [0, 0, 1, 0], [], []>} : vector<1x128xf32>, vector<8x128xf32>, vector<1x8xf32> -> vector<1x8xf32>
    %c0_41 = arith.constant 0 : index
    %c1664 = arith.constant 1664 : index
    %103 = vector.load %arg4[%c0_41, %c1664] : memref<1x1665xf32, #tpu.memory_space<vmem>>, vector<1x1xf32>
    %104 = vector.broadcast %103 : vector<1x1xf32> to vector<1x8xf32>
    %105 = arith.addf %102, %104 : vector<1x8xf32>
    %106 = arith.negf %105 : vector<1x8xf32>
    %107 = math.exp %106 : vector<1x8xf32>
    %cst_42 = arith.constant 1.000000e+00 : f32
    %108 = vector.broadcast %cst_42 : f32 to vector<1x8xf32>
    %109 = arith.addf %108, %107 : vector<1x8xf32>
    %110 = arith.divf %108, %109 : vector<1x8xf32>
    %c0_43 = arith.constant 0 : index
    %c0_44 = arith.constant 0 : index
    %111 = vector.load %arg5[%c0_43, %c0_44] : memref<1x8xf32, #tpu.memory_space<vmem>>, vector<1x8xf32>
    tpu.vector_store %arg5[%c0_43, %c0_44], %110 {strides = array<i32>} : memref<1x8xf32, #tpu.memory_space<vmem>>, vector<1x8xf32>,
    return
  }
}

</mosaic_0001>

<llo_original>
// kernel: custom-call
$region0: #{custom-call}
  %s0 = inlined_call_operand.vmem [shape: f32[1665], index: 0, kind: output, shape index: {}]

// kernel: routing_b3_forward.1
$region0: #{routing_b3_forward.1}
  #allocation0 [shape = 'u32[]', space=smem, size = 0x4, offset = 0x4, fixed_abs, tag = 'smem constant byte address 0x4 - core index']
  #allocation1 [shape = 'u32[144,128]{1,0:T(1,128)}', space=vmem, size = 0x12000, scoped, tag = 'internal scratch']
  %s0 = inlined_call_operand.vmem [shape: bf16[8,32], index: 0, kind: input, shape index: {}]
  %s1 = inlined_call_operand.vmem [shape: bf16[32,128], index: 1, kind: input, shape index: {}]
  %s2 = inlined_call_operand.vmem [shape: bf16[128,256], index: 2, kind: input, shape index: {}]
  %s3 = inlined_call_operand.vmem [shape: bf16[256,128], index: 3, kind: input, shape index: {}]
  %s4 = inlined_call_operand.vmem [shape: f32[1,1665], index: 4, kind: input, shape index: {}]
  %s5 = inlined_call_operand.hbm [shape: f32[1,8], index: 5, kind: output, shape index: {}]
  %s6 = sld [smem:[#allocation0]]
  $region30: #{routing_b3_forward.1} parent=0
    _
  %s8 = ssub.s32 1, %s6
  %s9 = scalar_select 0, %s8, %s6
  $region1: #{routing_b3_forward.1} parent=0
    #allocation2 [shape = 'u8[512]{0}', space=vmem, size = 0x400, scoped, tag = 'output window, operand 0, single buffered']
    #allocation3 [shape = 's32[1]{0}', space=sflag, size = 0x4, scoped, tag = 'scoped memory for routing_b3_forward.1']
    %10 = vsyncpa [#allocation3], 0
    // Predicated region
    $region2: #{routing_b3_forward.1} parent=1 // pred_check
      _
    $region3: #{routing_b3_forward.1} parent=1 // pred_check_branch
      %12 = sbr.rel (0) target = $region5
    $region4: #{routing_b3_forward.1} parent=1 // pred_region
      _
    $region5: #{routing_b3_forward.1} parent=1 // pred_fallthru
      _
    // Predicated region
    $region6: #{routing_b3_forward.1} parent=1 // pred_check
      _
    $region7: #{routing_b3_forward.1} parent=1 // pred_check_branch
      %14 = sbr.rel (0) target = $region9
    $region8: #{routing_b3_forward.1} parent=1 // pred_region
      _
    $region9: #{routing_b3_forward.1} parent=1 // pred_fallthru
      _
    // Predicated region
    $region10: #{routing_b3_forward.1} parent=1 // pred_check
      _
    $region11: #{routing_b3_forward.1} parent=1 // pred_check_branch
      %16 = sbr.rel (0) target = $region13
    $region12: #{routing_b3_forward.1} parent=1 // pred_region
      _
    $region13: #{routing_b3_forward.1} parent=1 // pred_fallthru
      _
    // Predicated region
    $region14: #{routing_b3_forward.1} parent=1 // pred_check
      _
    $region15: #{routing_b3_forward.1} parent=1 // pred_check_branch
      %18 = sbr.rel (0) target = $region17
    $region16: #{routing_b3_forward.1} parent=1 // pred_region
      _
    $region17: #{routing_b3_forward.1} parent=1 // pred_fallthru
      _
    // Predicated region
    $region18: #{routing_b3_forward.1} parent=1 // pred_check
      _
    $region19: #{routing_b3_forward.1} parent=1 // pred_check_branch
      %20 = sbr.rel (0) target = $region21
    $region20: #{routing_b3_forward.1} parent=1 // pred_region
      _
    $region21: #{routing_b3_forward.1} parent=1 // pred_fallthru
      _
    %v22 = vld [vmem:[%s0] sm:$0xf]
    %v23 = vld [vmem:[%s1] sm:$0xf]
    %v24 = vld [vmem:[%s1 + $0x4] sm:$0xf]
    %v25 = vld [vmem:[%s1 + $0x8] sm:$0xf]
    %v26 = vld [vmem:[%s1 + $0xc] sm:$0xf]
    %v27 = vld [vmem:[%s4] sm:$0x1]
    %v29 = vlaneseq
    %v30 = vshrl.u32 %v29, 7
    %v31 = vsub.s32 0, %v30
    %v32 = vrot.slane %v27, %v31
    %v38 = vunpack.c.l.b16 %v23
    %v39 = vunpack.c.l.b16 %v24
    %v40 = vunpack.c.l.b16 %v25
    %v41 = vunpack.c.l.b16 %v26
    %v42 = vpack.c.b16 %v39, %v38
    %v43 = vpack.c.b16 %v41, %v40
    %vm46 = vcmask 261120
    %v48 = vsel %vm46, %v22, 0
    %50 = vmatprep.subr.bf16.mxu0 0
    %51 = vmatpush1.bf16.msra.mxu0 %v42
    %52 = vmatprep.subr.bf16.mxu0 0
    %53 = vmatpush1.bf16.msra.mxu0 %v43
    %54 = vmatprep.subr.bf16.mxu0 0
    %55 = vmatpush1.bf16.msra.mxu0 0
    %56 = vmatprep.subr.bf16.mxu0 0
    %57 = vmatpush1.bf16.msra.mxu0 0
    %58 = vmatprep.subr.bf16.mxu0 0
    %59 = vmatpush1.bf16.msra.mxu0 0
    %60 = vmatprep.subr.bf16.mxu0 0
    %61 = vmatpush1.bf16.msra.mxu0 0
    %62 = vmatprep.subr.bf16.mxu0 0
    %63 = vmatpush1.bf16.msra.mxu0 0
    %64 = vmatprep.subr.bf16.mxu0 0
    %65 = vmatpush1.bf16.msra.mxu0 0
    %66 = vmatprep.subr.bf16.mxu0 0
    %67 = vmatpush1.bf16.msra.mxu0 0
    %68 = vmatprep.subr.bf16.mxu0 0
    %69 = vmatpush1.bf16.msra.mxu0 0
    %70 = vmatprep.subr.bf16.mxu0 0
    %71 = vmatpush1.bf16.msra.mxu0 0
    %72 = vmatprep.subr.bf16.mxu0 0
    %73 = vmatpush1.bf16.msra.mxu0 0
    %74 = vmatprep.subr.bf16.mxu0 0
    %75 = vmatpush1.bf16.msra.mxu0 0
    %76 = vmatprep.subr.bf16.mxu0 0
    %77 = vmatpush1.bf16.msra.mxu0 0
    %78 = vmatprep.subr.bf16.mxu0 0
    %79 = vmatpush1.bf16.msra.mxu0 0
    %80 = vmatprep.subr.bf16.mxu0 0
    %81 = vmatpush1.bf16.msra.mxu0 0
    %82 = vmatprep.mubr.bf16.mxu0 0
    %83 = vmatmul.mubr.bf16.gmra.mrb[0].mxu0 %v48
    %v84 = vpop.f32.mrb[0].mxu0
    %v85 = vadd.f32 %v32, %v84
    %v86 = vpop.f32.mrb[0].mxu0
    %v87 = vpop.f32.mrb[0].mxu0
    %v88 = vpop.f32.mrb[0].mxu0
    %89 = vdwg.mxu0
    %v90 = vld [vmem:[%s4 + $0x1] sm:$0x1]
    %v91 = vld [vmem:[%s4 + $0x2] sm:$0x1]
    %v92 = vrot.slane %v85, 4
    %v93 = vadd.f32 %v85, %v92
    %v94 = vrot.slane %v93, 2
    %v95 = vadd.f32 %v93, %v94
    %v96 = vrot.slane %v95, 1
    %v97 = vadd.f32 %v95, %v96
    %v98 = vrcp.pop 8.0
    %v99 = vmul.f32 %v97, %v98
    %v100 = vmul.f32 %v85, %v85
    %v101 = vrot.slane %v100, 4
    %v102 = vadd.f32 %v100, %v101
    %v103 = vrot.slane %v102, 2
    %v104 = vadd.f32 %v102, %v103
    %v105 = vrot.slane %v104, 1
    %v106 = vadd.f32 %v104, %v105
    %v107 = vmul.f32 %v106, %v98
    %v108 = vmul.f32 %v99, %v99
    %v109 = vsub.f32 %v107, %v108
    %v110 = vadd.f32 %v109, 1e-05
    %v111 = vrsqrt.pop %v110
    %v112 = vmul.f32 %v90, %v111
    %v113 = vmul.f32 %v99, %v112
    %v114 = vsub.f32 %v91, %v113
    %v116 = vlaneseq
    %v117 = vshrl.u32 %v116, 7
    %v118 = vsub.s32 0, %v117
    %v119 = vrot.slane %v112, %v118
    %v121 = vmul.f32 %v85, %v119
    %v123 = vlaneseq
    %v124 = vshrl.u32 %v123, 7
    %v125 = vsub.s32 0, %v124
    %v126 = vrot.slane %v114, %v125
    %v128 = vadd.f32 %v121, %v126
    %v129 = vmax.f32 %v128, 0.0
    %v130 = vpack.c.bf16 %v129, %v129
    %v131 = vld [vmem:[%s2] sm:$0xff]
    %v132 = vld [vmem:[%s2 + $0x8] sm:$0xff]
    %v133 = vld [vmem:[%s2 + $0x10] sm:$0xff]
    %v134 = vld [vmem:[%s2 + $0x18] sm:$0xff]
    %v135 = vld [vmem:[%s2 + $0x20] sm:$0xff]
    %v136 = vld [vmem:[%s2 + $0x28] sm:$0xff]
    %v137 = vld [vmem:[%s2 + $0x30] sm:$0xff]
    %v138 = vld [vmem:[%s2 + $0x38] sm:$0xff]
    %v139 = vld [vmem:[%s2 + $0x40] sm:$0xff]
    %v140 = vld [vmem:[%s2 + $0x48] sm:$0xff]
    %v141 = vld [vmem:[%s2 + $0x50] sm:$0xff]
    %v142 = vld [vmem:[%s2 + $0x58] sm:$0xff]
    %v143 = vld [vmem:[%s2 + $0x60] sm:$0xff]
    %v144 = vld [vmem:[%s2 + $0x68] sm:$0xff]
    %v145 = vld [vmem:[%s2 + $0x70] sm:$0xff]
    %v146 = vld [vmem:[%s2 + $0x78] sm:$0xff]
    %v147 = vld [vmem:[%s4 + $0x3] sm:$0x3]
    %v149 = vlaneseq
    %v150 = vshrl.u32 %v149, 7
    %v151 = vsub.s32 0, %v150
    %v152 = vrot.slane %v147, %v151
    %v153 = vlaneseq
    %v154 = vshrl.u32 %v153, 7
    %v155 = vsub.s32 1, %v154
    %v156 = vrot.slane %v147, %v155
    %v175 = vunpack.c.l.b16 %v131
    %v176 = vunpack.c.h.b16 %v131
    %v177 = vunpack.c.l.b16 %v132
    %v178 = vunpack.c.h.b16 %v132
    %v179 = vunpack.c.l.b16 %v133
    %v180 = vunpack.c.h.b16 %v133
    %v181 = vunpack.c.l.b16 %v134
    %v182 = vunpack.c.h.b16 %v134
    %v183 = vunpack.c.l.b16 %v135
    %v184 = vunpack.c.h.b16 %v135
    %v185 = vunpack.c.l.b16 %v136
    %v186 = vunpack.c.h.b16 %v136
    %v187 = vunpack.c.l.b16 %v137
    %v188 = vunpack.c.h.b16 %v137
    %v189 = vunpack.c.l.b16 %v138
    %v190 = vunpack.c.h.b16 %v138
    %v191 = vunpack.c.l.b16 %v139
    %v192 = vunpack.c.h.b16 %v139
    %v193 = vunpack.c.l.b16 %v140
    %v194 = vunpack.c.h.b16 %v140
    %v195 = vunpack.c.l.b16 %v141
    %v196 = vunpack.c.h.b16 %v141
    %v197 = vunpack.c.l.b16 %v142
    %v198 = vunpack.c.h.b16 %v142
    %v199 = vunpack.c.l.b16 %v143
    %v200 = vunpack.c.h.b16 %v143
    %v201 = vunpack.c.l.b16 %v144
    %v202 = vunpack.c.h.b16 %v144
    %v203 = vunpack.c.l.b16 %v145
    %v204 = vunpack.c.h.b16 %v145
    %v205 = vunpack.c.l.b16 %v146
    %v206 = vunpack.c.h.b16 %v146
    %v207 = vpack.c.b16 %v177, %v175
    %v208 = vpack.c.b16 %v178, %v176
    %v209 = vpack.c.b16 %v181, %v179
    %v210 = vpack.c.b16 %v182, %v180
    %v211 = vpack.c.b16 %v185, %v183
    %v212 = vpack.c.b16 %v186, %v184
    %v213 = vpack.c.b16 %v189, %v187
    %v214 = vpack.c.b16 %v190, %v188
    %v215 = vpack.c.b16 %v193, %v191
    %v216 = vpack.c.b16 %v194, %v192
    %v217 = vpack.c.b16 %v197, %v195
    %v218 = vpack.c.b16 %v198, %v196
    %v219 = vpack.c.b16 %v201, %v199
    %v220 = vpack.c.b16 %v202, %v200
    %v221 = vpack.c.b16 %v205, %v203
    %v222 = vpack.c.b16 %v206, %v204
    %239 = vmatprep.subr.bf16.mxu0 %v208
    %240 = vmatpush1.bf16.msra.mxu0 %v207
    %241 = vmatprep.subr.bf16.mxu0 %v210
    %242 = vmatpush1.bf16.msra.mxu0 %v209
    %243 = vmatprep.subr.bf16.mxu0 %v212
    %244 = vmatpush1.bf16.msra.mxu0 %v211
    %245 = vmatprep.subr.bf16.mxu0 %v214
    %246 = vmatpush1.bf16.msra.mxu0 %v213
    %247 = vmatprep.subr.bf16.mxu0 %v216
    %248 = vmatpush1.bf16.msra.mxu0 %v215
    %249 = vmatprep.subr.bf16.mxu0 %v218
    %250 = vmatpush1.bf16.msra.mxu0 %v217
    %251 = vmatprep.subr.bf16.mxu0 %v220
    %252 = vmatpush1.bf16.msra.mxu0 %v219
    %253 = vmatprep.subr.bf16.mxu0 %v222
    %254 = vmatpush1.bf16.msra.mxu0 %v221
    %255 = vmatprep.subr.bf16.mxu0 0
    %256 = vmatpush1.bf16.msra.mxu0 0
    %257 = vmatprep.subr.bf16.mxu0 0
    %258 = vmatpush1.bf16.msra.mxu0 0
    %259 = vmatprep.subr.bf16.mxu0 0
    %260 = vmatpush1.bf16.msra.mxu0 0
    %261 = vmatprep.subr.bf16.mxu0 0
    %262 = vmatpush1.bf16.msra.mxu0 0
    %263 = vmatprep.subr.bf16.mxu0 0
    %264 = vmatpush1.bf16.msra.mxu0 0
    %265 = vmatprep.subr.bf16.mxu0 0
    %266 = vmatpush1.bf16.msra.mxu0 0
    %267 = vmatprep.subr.bf16.mxu0 0
    %268 = vmatpush1.bf16.msra.mxu0 0
    %269 = vmatprep.subr.bf16.mxu0 0
    %270 = vmatpush1.bf16.msra.mxu0 0
    %271 = vmatprep.mubr.bf16.mxu0 0
    %272 = vmatmul.mubr.bf16.gmra.mrb[0].mxu0 %v130
    %v273 = vpop.f32.mrb[0].mxu0
    %v274 = vadd.f32 %v152, %v273
    %v275 = vpop.f32.mrb[0].mxu0
    %v276 = vadd.f32 %v156, %v275
    %v277 = vpop.f32.mrb[0].mxu0
    %v278 = vpop.f32.mrb[0].mxu0
    %279 = vdwg.mxu0
    %v280 = vld [vmem:[%s4 + $0x5] sm:$0x3]
    %v281 = vld [vmem:[%s4 + $0x7] sm:$0x3]
    %v282 = vrot.slane %v274, 4
    %v283 = vadd.f32 %v274, %v282
    %v284 = vrot.slane %v283, 2
    %v285 = vadd.f32 %v283, %v284
    %v286 = vrot.slane %v285, 1
    %v287 = vadd.f32 %v285, %v286
    %v288 = vrot.slane %v276, 4
    %v289 = vadd.f32 %v276, %v288
    %v290 = vrot.slane %v289, 2
    %v291 = vadd.f32 %v289, %v290
    %v292 = vrot.slane %v291, 1
    %v293 = vadd.f32 %v291, %v292
    %v294 = vmul.f32 %v287, %v98
    %v295 = vmul.f32 %v293, %v98
    %v296 = vmul.f32 %v274, %v274
    %v297 = vmul.f32 %v276, %v276
    %v298 = vrot.slane %v296, 4
    %v299 = vadd.f32 %v296, %v298
    %v300 = vrot.slane %v299, 2
    %v301 = vadd.f32 %v299, %v300
    %v302 = vrot.slane %v301, 1
    %v303 = vadd.f32 %v301, %v302
    %v304 = vrot.slane %v297, 4
    %v305 = vadd.f32 %v297, %v304
    %v306 = vrot.slane %v305, 2
    %v307 = vadd.f32 %v305, %v306
    %v308 = vrot.slane %v307, 1
    %v309 = vadd.f32 %v307, %v308
    %v310 = vmul.f32 %v303, %v98
    %v311 = vmul.f32 %v309, %v98
    %v312 = vmul.f32 %v294, %v294
    %v313 = vmul.f32 %v295, %v295
    %v314 = vsub.f32 %v310, %v312
    %v315 = vsub.f32 %v311, %v313
    %v316 = vadd.f32 %v314, 1e-05
    %v317 = vadd.f32 %v315, 1e-05
    %v318 = vrsqrt.pop %v316
    %v319 = vrsqrt.pop %v317
    %v322 = vcombine.low %v318, %v319
    %v324 = vunpack.c.l.s4 1966171168
    %v325 = vunpack.c.0.s8 %v324
    %v326 = vlaneseq
    %v327 = vshrl.u32 %v326, 7
    %v328 = vsub.s32 %v325, %v327
    %v329 = vrot.slane %v322, %v328
    %v331 = vunpack.c.l.s4 1966171168
    %v332 = vunpack.c.0.s8 %v331
    %v333 = vlaneseq
    %v334 = vshrl.u32 %v333, 7
    %v335 = vsub.s32 %v332, %v334
    %v336 = vrot.slane %v329, %v335
    %v338 = vmul.f32 %v280, %v336
    %v340 = vlaneseq
    %v341 = vshrl.u32 %v340, 7
    %v342 = vsub.s32 0, %v341
    %v343 = vrot.slane %v338, %v342
    %v344 = vlaneseq
    %v345 = vshrl.u32 %v344, 7
    %v346 = vsub.s32 1, %v345
    %v347 = vrot.slane %v338, %v346
    %v350 = vmul.f32 %v294, %v343
    %v351 = vmul.f32 %v295, %v347
    %v354 = vcombine.low %v350, %v351
    %v356 = vunpack.c.l.s4 1966171168
    %v357 = vunpack.c.0.s8 %v356
    %v358 = vlaneseq
    %v359 = vshrl.u32 %v358, 7
    %v360 = vsub.s32 %v357, %v359
    %v361 = vrot.slane %v354, %v360
    %v363 = vunpack.c.l.s4 1966171168
    %v364 = vunpack.c.0.s8 %v363
    %v365 = vlaneseq
    %v366 = vshrl.u32 %v365, 7
    %v367 = vsub.s32 %v364, %v366
    %v368 = vrot.slane %v361, %v367
    %v370 = vsub.f32 %v281, %v368
    %v371 = vmul.f32 %v274, %v343
    %v372 = vmul.f32 %v276, %v347
    %v374 = vlaneseq
    %v375 = vshrl.u32 %v374, 7
    %v376 = vsub.s32 0, %v375
    %v377 = vrot.slane %v370, %v376
    %v378 = vlaneseq
    %v379 = vshrl.u32 %v378, 7
    %v380 = vsub.s32 1, %v379
    %v381 = vrot.slane %v370, %v380
    %v384 = vadd.f32 %v371, %v377
    %v385 = vadd.f32 %v372, %v381
    %v386 = vmax.f32 %v384, 0.0
    %v387 = vmax.f32 %v385, 0.0
    %v388 = vmul.f32 %v386, %v386
    %v389 = vmul.f32 %v387, %v387
    %v390 = vadd.f32 %v388, %v389
    %391 = vadd.xlane.f32.xlu0 %v390
    %v392 = vpop.xlane.xlu0 %391
    %v393 = vmax.f32 %v392, 1e-24
    %v394 = vrsqrt.pop %v393
    %v395 = vmul.f32 %v386, %v394
    %v396 = vmul.f32 %v387, %v394
    %v397 = vpack.c.bf16 %v395, %v395
    %v398 = vpack.c.bf16 %v396, %v396
    %v399 = vld [vmem:[%s3] sm:$0xf]
    %v400 = vld [vmem:[%s3 + $0x4] sm:$0xf]
    %v401 = vld [vmem:[%s3 + $0x8] sm:$0xf]
    %v402 = vld [vmem:[%s3 + $0xc] sm:$0xf]
    %v403 = vld [vmem:[%s3 + $0x10] sm:$0xf]
    %v404 = vld [vmem:[%s3 + $0x14] sm:$0xf]
    %v405 = vld [vmem:[%s3 + $0x18] sm:$0xf]
    %v406 = vld [vmem:[%s3 + $0x1c] sm:$0xf]
    %v407 = vld [vmem:[%s3 + $0x20] sm:$0xf]
    %v408 = vld [vmem:[%s3 + $0x24] sm:$0xf]
    %v409 = vld [vmem:[%s3 + $0x28] sm:$0xf]
    %v410 = vld [vmem:[%s3 + $0x2c] sm:$0xf]
    %v411 = vld [vmem:[%s3 + $0x30] sm:$0xf]
    %v412 = vld [vmem:[%s3 + $0x34] sm:$0xf]
    %v413 = vld [vmem:[%s3 + $0x38] sm:$0xf]
    %v414 = vld [vmem:[%s3 + $0x3c] sm:$0xf]
    %v415 = vld [vmem:[%s3 + $0x40] sm:$0xf]
    %v416 = vld [vmem:[%s3 + $0x44] sm:$0xf]
    %v417 = vld [vmem:[%s3 + $0x48] sm:$0xf]
    %v418 = vld [vmem:[%s3 + $0x4c] sm:$0xf]
    %v419 = vld [vmem:[%s3 + $0x50] sm:$0xf]
    %v420 = vld [vmem:[%s3 + $0x54] sm:$0xf]
    %v421 = vld [vmem:[%s3 + $0x58] sm:$0xf]
    %v422 = vld [vmem:[%s3 + $0x5c] sm:$0xf]
    %v423 = vld [vmem:[%s3 + $0x60] sm:$0xf]
    %v424 = vld [vmem:[%s3 + $0x64] sm:$0xf]
    %v425 = vld [vmem:[%s3 + $0x68] sm:$0xf]
    %v426 = vld [vmem:[%s3 + $0x6c] sm:$0xf]
    %v427 = vld [vmem:[%s3 + $0x70] sm:$0xf]
    %v428 = vld [vmem:[%s3 + $0x74] sm:$0xf]
    %v429 = vld [vmem:[%s3 + $0x78] sm:$0xf]
    %v430 = vld [vmem:[%s3 + $0x7c] sm:$0xf]
    %v431 = vld [vmem:[%s4 + $0x9] sm:$0x1]
    %v433 = vlaneseq
    %v434 = vshrl.u32 %v433, 7
    %v435 = vsub.s32 0, %v434
    %v436 = vrot.slane %v431, %v435
    %v470 = vunpack.c.l.b16 %v399
    %v471 = vunpack.c.l.b16 %v400
    %v472 = vunpack.c.l.b16 %v401
    %v473 = vunpack.c.l.b16 %v402
    %v474 = vunpack.c.l.b16 %v403
    %v475 = vunpack.c.l.b16 %v404
    %v476 = vunpack.c.l.b16 %v405
    %v477 = vunpack.c.l.b16 %v406
    %v478 = vunpack.c.l.b16 %v407
    %v479 = vunpack.c.l.b16 %v408
    %v480 = vunpack.c.l.b16 %v409
    %v481 = vunpack.c.l.b16 %v410
    %v482 = vunpack.c.l.b16 %v411
    %v483 = vunpack.c.l.b16 %v412
    %v484 = vunpack.c.l.b16 %v413
    %v485 = vunpack.c.l.b16 %v414
    %v486 = vunpack.c.l.b16 %v415
    %v487 = vunpack.c.l.b16 %v416
    %v488 = vunpack.c.l.b16 %v417
    %v489 = vunpack.c.l.b16 %v418
    %v490 = vunpack.c.l.b16 %v419
    %v491 = vunpack.c.l.b16 %v420
    %v492 = vunpack.c.l.b16 %v421
    %v493 = vunpack.c.l.b16 %v422
    %v494 = vunpack.c.l.b16 %v423
    %v495 = vunpack.c.l.b16 %v424
    %v496 = vunpack.c.l.b16 %v425
    %v497 = vunpack.c.l.b16 %v426
    %v498 = vunpack.c.l.b16 %v427
    %v499 = vunpack.c.l.b16 %v428
    %v500 = vunpack.c.l.b16 %v429
    %v501 = vunpack.c.l.b16 %v430
    %v502 = vpack.c.b16 %v471, %v470
    %v503 = vpack.c.b16 %v473, %v472
    %v504 = vpack.c.b16 %v475, %v474
    %v505 = vpack.c.b16 %v477, %v476
    %v506 = vpack.c.b16 %v479, %v478
    %v507 = vpack.c.b16 %v481, %v480
    %v508 = vpack.c.b16 %v483, %v482
    %v509 = vpack.c.b16 %v485, %v484
    %v510 = vpack.c.b16 %v487, %v486
    %v511 = vpack.c.b16 %v489, %v488
    %v512 = vpack.c.b16 %v491, %v490
    %v513 = vpack.c.b16 %v493, %v492
    %v514 = vpack.c.b16 %v495, %v494
    %v515 = vpack.c.b16 %v497, %v496
    %v516 = vpack.c.b16 %v499, %v498
    %v517 = vpack.c.b16 %v501, %v500
    %534 = vmatprep.subr.bf16.mxu0 0
    %535 = vmatpush1.bf16.msra.mxu0 %v502
    %536 = vmatprep.subr.bf16.mxu0 0
    %537 = vmatpush1.bf16.msra.mxu0 %v503
    %538 = vmatprep.subr.bf16.mxu0 0
    %539 = vmatpush1.bf16.msra.mxu0 %v504
    %540 = vmatprep.subr.bf16.mxu0 0
    %541 = vmatpush1.bf16.msra.mxu0 %v505
    %542 = vmatprep.subr.bf16.mxu0 0
    %543 = vmatpush1.bf16.msra.mxu0 %v506
    %544 = vmatprep.subr.bf16.mxu0 0
    %545 = vmatpush1.bf16.msra.mxu0 %v507
    %546 = vmatprep.subr.bf16.mxu0 0
    %547 = vmatpush1.bf16.msra.mxu0 %v508
    %548 = vmatprep.subr.bf16.mxu0 0
    %549 = vmatpush1.bf16.msra.mxu0 %v509
    %550 = vmatprep.subr.bf16.mxu0 0
    %551 = vmatpush1.bf16.msra.mxu0 %v510
    %552 = vmatprep.subr.bf16.mxu0 0
    %553 = vmatpush1.bf16.msra.mxu0 %v511
    %554 = vmatprep.subr.bf16.mxu0 0
    %555 = vmatpush1.bf16.msra.mxu0 %v512
    %556 = vmatprep.subr.bf16.mxu0 0
    %557 = vmatpush1.bf16.msra.mxu0 %v513
    %558 = vmatprep.subr.bf16.mxu0 0
    %559 = vmatpush1.bf16.msra.mxu0 %v514
    %560 = vmatprep.subr.bf16.mxu0 0
    %561 = vmatpush1.bf16.msra.mxu0 %v515
    %562 = vmatprep.subr.bf16.mxu0 0
    %563 = vmatpush1.bf16.msra.mxu0 %v516
    %564 = vmatprep.subr.bf16.mxu0 0
    %565 = vmatpush1.bf16.msra.mxu0 %v517
    %566 = vmatprep.mubr.bf16.mxu0 %v398
    %567 = vmatmul.mubr.bf16.gmra.mrb[0].mxu0 %v397
    %v568 = vpop.f32.mrb[0].mxu0
    %v569 = vadd.f32 %v436, %v568
    %v570 = vpop.f32.mrb[0].mxu0
    %v571 = vpop.f32.mrb[0].mxu0
    %v572 = vpop.f32.mrb[0].mxu0
    %573 = vdwg.mxu0
    %v574 = vld [vmem:[%s4 + $0xa] sm:$0x1]
    %v575 = vld [vmem:[%s4 + $0xb] sm:$0x1]
    %v576 = vrot.slane %v569, 4
    %v577 = vadd.f32 %v569, %v576
    %v578 = vrot.slane %v577, 2
    %v579 = vadd.f32 %v577, %v578
    %v580 = vrot.slane %v579, 1
    %v581 = vadd.f32 %v579, %v580
    %v582 = vmul.f32 %v581, %v98
    %v583 = vmul.f32 %v569, %v569
    %v584 = vrot.slane %v583, 4
    %v585 = vadd.f32 %v583, %v584
    %v586 = vrot.slane %v585, 2
    %v587 = vadd.f32 %v585, %v586
    %v588 = vrot.slane %v587, 1
    %v589 = vadd.f32 %v587, %v588
    %v590 = vmul.f32 %v589, %v98
    %v591 = vmul.f32 %v582, %v582
    %v592 = vsub.f32 %v590, %v591
    %v593 = vadd.f32 %v592, 1e-05
    %v594 = vrsqrt.pop %v593
    %v595 = vmul.f32 %v574, %v594
    %v596 = vmul.f32 %v582, %v595
    %v597 = vsub.f32 %v575, %v596
    %v599 = vlaneseq
    %v600 = vshrl.u32 %v599, 7
    %v601 = vsub.s32 0, %v600
    %v602 = vrot.slane %v595, %v601
    %v604 = vmul.f32 %v569, %v602
    %v606 = vlaneseq
    %v607 = vshrl.u32 %v606, 7
    %v608 = vsub.s32 0, %v607
    %v609 = vrot.slane %v597, %v608
    %v611 = vadd.f32 %v604, %v609
    %v612 = vmax.f32 %v611, 0.0
    %v613 = vld [vmem:[%s4 + $0xc] sm:$0x1]
    %v614 = vld [vmem:[%s4 + $0xd] sm:$0x1]
    %616 = vset.pattern.permute.xlu0 0
    %617 = vperm.xlu0 %616, %v614
    %v618 = vpop.permute.xlu0 %617
    %v620 = vlaneseq
    %v621 = vshrl.u32 %v620, 7
    %v622 = vsub.s32 0, %v621
    %v623 = vrot.slane %v618, %v622
    %624 = vmatprep.subr.mxu0 0.0
    %625 = vmatpush1.xpose.msra.mxu0 %v612
    %626 = vmatprep.subr.mxu0 0.0
    %627 = vmatpush1.xpose.msra.mxu0 0.0
    %628 = vmatprep.subr.mxu0 0.0
    %629 = vmatpush1.xpose.msra.mxu0 0.0
    %630 = vmatprep.subr.mxu0 0.0
    %631 = vmatpush1.xpose.msra.mxu0 0.0
    %632 = vmatprep.subr.mxu0 0.0
    %633 = vmatpush1.xpose.msra.mxu0 0.0
    %634 = vmatprep.subr.mxu0 0.0
    %635 = vmatpush1.xpose.msra.mxu0 0.0
    %636 = vmatprep.subr.mxu0 0.0
    %637 = vmatpush1.xpose.msra.mxu0 0.0
    %638 = vmatprep.subr.mxu0 0.0
    %639 = vmatpush1.xpose.msra.mxu0 0.0
    %640 = vmatprep.subr.mxu0 0.0
    %641 = vmatpush1.xpose.msra.mxu0 0.0
    %642 = vmatprep.subr.mxu0 0.0
    %643 = vmatpush1.xpose.msra.mxu0 0.0
    %644 = vmatprep.subr.mxu0 0.0
    %645 = vmatpush1.xpose.msra.mxu0 0.0
    %646 = vmatprep.subr.mxu0 0.0
    %647 = vmatpush1.xpose.msra.mxu0 0.0
    %648 = vmatprep.subr.mxu0 0.0
    %649 = vmatpush1.xpose.msra.mxu0 0.0
    %650 = vmatprep.subr.mxu0 0.0
    %651 = vmatpush1.xpose.msra.mxu0 0.0
    %652 = vmatprep.subr.mxu0 0.0
    %653 = vmatpush1.xpose.msra.mxu0 0.0
    %654 = vmatprep.subr.mxu0 0.0
    %655 = vmatpush1.xpose.msra.mxu0 0.0
    %656 = vmatprep.subr.mxu0 0.0
    %657 = vmatpush1.xpose.msra.mxu0 0.0
    %658 = vmatprep.subr.mxu0 0.0
    %659 = vmatpush1.xpose.msra.mxu0 0.0
    %660 = vmatprep.subr.mxu0 0.0
    %661 = vmatpush1.xpose.msra.mxu0 0.0
    %662 = vmatprep.subr.mxu0 0.0
    %663 = vmatpush1.xpose.msra.mxu0 0.0
    %664 = vmatprep.subr.mxu0 0.0
    %665 = vmatpush1.xpose.msra.mxu0 0.0
    %666 = vmatprep.subr.mxu0 0.0
    %667 = vmatpush1.xpose.msra.mxu0 0.0
    %668 = vmatprep.subr.mxu0 0.0
    %669 = vmatpush1.xpose.msra.mxu0 0.0
    %670 = vmatprep.subr.mxu0 0.0
    %671 = vmatpush1.xpose.msra.mxu0 0.0
    %672 = vmatprep.subr.mxu0 0.0
    %673 = vmatpush1.xpose.msra.mxu0 0.0
    %674 = vmatprep.subr.mxu0 0.0
    %675 = vmatpush1.xpose.msra.mxu0 0.0
    %676 = vmatprep.subr.mxu0 0.0
    %677 = vmatpush1.xpose.msra.mxu0 0.0
    %678 = vmatprep.subr.mxu0 0.0
    %679 = vmatpush1.xpose.msra.mxu0 0.0
    %680 = vmatprep.subr.mxu0 0.0
    %681 = vmatpush1.xpose.msra.mxu0 0.0
    %682 = vmatprep.subr.mxu0 0.0
    %683 = vmatpush1.xpose.msra.mxu0 0.0
    %684 = vmatprep.subr.mxu0 0.0
    %685 = vmatpush1.xpose.msra.mxu0 0.0
    %686 = vmatprep.subr.mxu0 0.0
    %687 = vmatpush1.xpose.msra.mxu0 0.0
    %688 = vmatprep.mubr.f32.mxu0 0.0
    %689 = vmatmul.mubr.f32.gmra.mrb[0].mxu0 %v613
    %v690 = vpop.f32.mrb[0].mxu0
    %v691 = vadd.f32 %v623, %v690
    %v692 = vpop.f32.mrb[0].mxu0
    %693 = vdwg.mxu0
    %v694 = vxor.u32 %v691, 2147483648
    %v695 = vmul.f32 %v694, 1.442695
    %v696 = vpow.pop %v695
    %v697 = vadd.f32 %v696, 1.0
    %v698 = vrcp.pop %v697
    %v699 = vmul.f32 1.0, %v698
    %vm700 = vcmask 57344
    %701 = vst.msk [vmem:[#allocation2] sm:$0x1] %vm700, %v699
    // Predicated region
    $region22: #{routing_b3_forward.1} parent=1 // pred_check
      _
    $region23: #{routing_b3_forward.1} parent=1 // pred_check_branch
      %703 = sbr.rel (0) target = $region25
    $region24: #{routing_b3_forward.1} parent=1 // pred_region
      %s705 = ssub.s32 16, 16
      %706 = vsyncadd [#allocation3], %s705
      %s708 = sshll.u32 [#allocation2], 4
      %s709 = int_to_ptr.vmem [resolvable:$true] %s708
      %711 = dma.vmem_to_hbm [thread:$0]  %s709, 16, %s5, [#allocation3]
    $region25: #{routing_b3_forward.1} parent=1 // pred_fallthru
      _
    // Predicated region
    $region26: #{routing_b3_forward.1} parent=1 // pred_check
      _
    $region27: #{routing_b3_forward.1} parent=1 // pred_check_branch
      %713 = sbr.rel (0) target = $region29
    $region28: #{routing_b3_forward.1} parent=1 // pred_region
      %714 = dma.done [#allocation3], 16
    $region29: #{routing_b3_forward.1} parent=1 // pred_fallthru
      _
    %715 = vsyncpa [#allocation3], 1

</llo_original>
